<compile_context>
chip_gen: v7x
topology: tpu7x:2x2x1
jax: 0.10.0
libtpu: 0.0.40
codegen_flags: <defaults>
</compile_context>

<pallas_src>
import math
from functools import partial

import jax
import jax.numpy as jnp
from jax.experimental import pallas as pl
from jax.experimental.pallas import tpu as pltpu


# ----------------------------------------------------------------------------
# Helpers
# ----------------------------------------------------------------------------
def _llama_hidden_dim(dim: int, multiple_of: int, ffn_dim_multiplier=None) -> int:
    hidden_dim = 4 * dim
    hidden_dim = int(2 * hidden_dim / 3)
    if ffn_dim_multiplier is not None:
        hidden_dim = int(ffn_dim_multiplier * hidden_dim)
    return multiple_of * ((hidden_dim + multiple_of - 1) // multiple_of)


def _round_up(x: int, m: int) -> int:
    return ((x + m - 1) // m) * m


# ----------------------------------------------------------------------------
# Kernel
# ----------------------------------------------------------------------------
def _ffn_kernel(x_ref, w13_ref, w2t_ref, o_ref, acc_ref):
    """One (token-tile, hidden-tile) grid step of the SwiGLU FFN.

    x_ref   : (tm, dim)     bf16   token tile (resident across the hidden axis)
    w13_ref : (dim, 2*tk)   bf16   [ w1^T hidden-tile | w3^T hidden-tile ]
    w2t_ref : (tk, dim)     bf16   w2^T hidden-tile
    o_ref   : (tm, dim)            written on the last hidden step
    acc_ref : (tm, dim)     f32    accumulator scratch
    """
    k = pl.program_id(1)

    @pl.when(k == 0)
    def _():
        acc_ref[...] = jnp.zeros_like(acc_ref)

    tk = w13_ref.shape[1] // 2

    # Single fused MXU pass for the w1 AND w3 projections: bf16 in, f32 acc.
    h = jnp.dot(x_ref[...], w13_ref[...], preferred_element_type=jnp.float32)
    h1 = h[:, :tk]      # w1(x) tile   (tile-aligned slice: tk % 128 == 0)
    h3 = h[:, tk:]      # w3(x) tile

    # SwiGLU gate in f32 on the VPU/EUP.
    gated = (h1 * jax.nn.sigmoid(h1)) * h3

    # Down-projection: bf16 LHS, f32 accumulation into the resident accumulator.
    acc_ref[...] += jnp.dot(gated.astype(w2t_ref.dtype), w2t_ref[...],
                            preferred_element_type=jnp.float32)

    @pl.when(k == pl.num_programs(1) - 1)
    def _():
        o_ref[...] = acc_ref[...].astype(o_ref.dtype)


# ----------------------------------------------------------------------------
# One-time weight preparation (do this at load time, NOT per forward call)
# ----------------------------------------------------------------------------
def prepare_ffn_weights(w1, w2, w3, *, tk, compute_dtype=jnp.bfloat16):
    """Transpose, fuse w1/w3 per hidden tile, and cast to the compute dtype.

    torch nn.Linear layout in:  w1, w3: (hidden, dim), w2: (dim, hidden)
    Returns:
      w13t: (dim, 2*hidden) where hidden-tile k (width 2*tk) is
            [ w1^T[:, k*tk:(k+1)*tk] | w3^T[:, k*tk:(k+1)*tk] ]
      w2t : (hidden, dim)
    """
    hidden, dim = w1.shape
    assert hidden % tk == 0 and tk % 128 == 0, "tk must divide hidden and be a multiple of 128"
    nk = hidden // tk
    w1t = w1.T.astype(compute_dtype)            # (dim, hidden)
    w3t = w3.T.astype(compute_dtype)            # (dim, hidden)
    w13t = jnp.concatenate(
        [w1t.reshape(dim, nk, tk), w3t.reshape(dim, nk, tk)], axis=-1
    ).reshape(dim, 2 * hidden)
    w2t = w2.T.astype(compute_dtype)            # (hidden, dim)
    return w13t, w2t


# ----------------------------------------------------------------------------
# Wrapper
# ----------------------------------------------------------------------------
def feed_forward_pallas(x, w13t, w2t, *, tk, tm=128, vmem_limit_bytes=None):
    """x: [batch, seq, dim]; w13t/w2t from prepare_ffn_weights(tk=tk)."""
    batch, seq, dim = x.shape
    hidden = w2t.shape[0]
    assert dim % 128 == 0, "model dim must be lane-aligned (multiple of 128)"
    assert w13t.shape == (dim, 2 * hidden)
    assert hidden % tk == 0 and tk % 128 == 0

    tokens = batch * seq
    # Shrink the token tile for tiny inputs; pad tokens up to a tile multiple.
    tm = min(tm, _round_up(tokens, 8))
    tokens_pad = _round_up(tokens, tm)

    x2d = x.reshape(tokens, dim).astype(w13t.dtype)
    if tokens_pad != tokens:
        x2d = jnp.pad(x2d, ((0, tokens_pad - tokens), (0, 0)))

    n_tok_tiles = tokens_pad // tm
    n_hid_tiles = hidden // tk

    itemsize = lambda a: a.dtype.itemsize
    cost = pl.CostEstimate(
        flops=6 * tokens_pad * dim * hidden,          # 4*T*d*h (up-proj) + 2*T*h*d (down-proj)
        transcendentals=tokens_pad * hidden,          # sigmoid
        bytes_accessed=(x2d.size * itemsize(x2d)
                        + n_tok_tiles * (w13t.size * itemsize(w13t) + w2t.size * itemsize(w2t))
                        + tokens_pad * dim * x.dtype.itemsize),
    )

    cp_kwargs = dict(dimension_semantics=("parallel", "arbitrary"))
    if vmem_limit_bytes is not None:
        cp_kwargs["vmem_limit_bytes"] = vmem_limit_bytes

    out2d = pl.pallas_call(
        _ffn_kernel,
        out_shape=jax.ShapeDtypeStruct((tokens_pad, dim), x.dtype),
        grid_spec=pltpu.PrefetchScalarGridSpec(
            num_scalar_prefetch=0,
            grid=(n_tok_tiles, n_hid_tiles),
            in_specs=[
                pl.BlockSpec((tm, dim), lambda i, k: (i, 0)),        # x tile (resident over k)
                pl.BlockSpec((dim, 2 * tk), lambda i, k: (0, k)),    # fused [w1^T|w3^T] tile
                pl.BlockSpec((tk, dim), lambda i, k: (k, 0)),        # w2^T tile
            ],
            out_specs=pl.BlockSpec((tm, dim), lambda i, k: (i, 0)),  # resident accumulator output
            scratch_shapes=[pltpu.VMEM((tm, dim), jnp.float32)],
        ),
        compiler_params=pltpu.CompilerParams(**cp_kwargs),
        cost_estimate=cost,
    )(x2d, w13t, w2t)

    return out2d[:tokens].reshape(batch, seq, dim)


# ----------------------------------------------------------------------------
# References / demo
# ----------------------------------------------------------------------------
def _init_linear_weight(key, out_features, in_features, dtype=jnp.float32):
    # nn.Linear default init: U(-1/sqrt(fan_in), 1/sqrt(fan_in))
    bound = 1.0 / math.sqrt(in_features)
    return jax.random.uniform(key, (out_features, in_features),
                              minval=-bound, maxval=bound, dtype=dtype)


def _reference_f32(x, w1, w2, w3):
    h1 = jnp.einsum("bsd,hd->bsh", x, w1, preferred_element_type=jnp.float32)
    h3 = jnp.einsum("bsd,hd->bsh", x, w3, preferred_element_type=jnp.float32)
    g = h1 * jax.nn.sigmoid(h1) * h3
    return jnp.einsum("bsh,dh->bsd", g, w2, preferred_element_type=jnp.float32)


def _reference_matched(x, w1, w2, w3):
    # Same bf16-input / f32-accumulate recipe as the kernel.
    xb = x.astype(jnp.bfloat16)
    w1b, w2b, w3b = (w.astype(jnp.bfloat16) for w in (w1, w2, w3))
    h1 = jnp.einsum("bsd,hd->bsh", xb, w1b, preferred_element_type=jnp.float32)
    h3 = jnp.einsum("bsd,hd->bsh", xb, w3b, preferred_element_type=jnp.float32)
    g = (h1 * jax.nn.sigmoid(h1) * h3).astype(jnp.bfloat16)
    return jnp.einsum("bsh,dh->bsd", g, w2b, preferred_element_type=jnp.float32)


if __name__ == "__main__":
    # Small, LLaMA-consistent shapes.
    batch, seq, dim, multiple_of = 2, 8, 256, 128
    hidden = _llama_hidden_dim(dim, multiple_of)          # = 768
    tk = 256                                              # exercises 3 hidden-tile accumulation steps

    key = jax.random.PRNGKey(0)
    kx, k1, k2, k3 = jax.random.split(key, 4)

    x = jax.random.normal(kx, (batch, seq, dim), dtype=jnp.float32)
    w1 = _init_linear_weight(k1, hidden, dim)             # (hidden, dim)
    w2 = _init_linear_weight(k2, dim, hidden)             # (dim, hidden)
    w3 = _init_linear_weight(k3, hidden, dim)             # (hidden, dim)

    # One-time weight prep (transpose + w1/w3 fusion + bf16 cast).
    w13t, w2t = prepare_ffn_weights(w1, w2, w3, tk=tk)

    out = feed_forward_pallas(x, w13t, w2t, tk=tk, tm=128)
    out = jax.block_until_ready(out)
    assert out.shape == (batch, seq, dim)

    # Tight check against a precision-matched reference (bf16 in / f32 acc).
    ref_m = _reference_matched(x, w1, w2, w3)
    assert jnp.allclose(out, ref_m, atol=1e-2, rtol=1e-2), "mismatch vs matched-precision reference"

    # Loose check against the full-f32 torch-semantics reference.
    ref_f = _reference_f32(x, w1, w2, w3)
    assert jnp.allclose(out, ref_f, atol=5e-2, rtol=5e-2), "mismatch vs f32 reference"

    print("KERNEL_OK")
</pallas_src>

<mosaic_0001>
module attributes {stable_mosaic.version = 11 : i64} {
  func.func @_ffn_kernel(%arg0: i32, %arg1: i32, %arg2: memref<16x256xbf16, #tpu.memory_space<vmem>>, %arg3: memref<256x512xbf16, #tpu.memory_space<vmem>>, %arg4: memref<256x256xbf16, #tpu.memory_space<vmem>>, %arg5: memref<16x256xf32, #tpu.memory_space<vmem>>, %arg6: memref<16x256xf32, #tpu.memory_space<vmem>>) attributes {dimension_semantics = [#tpu.dimension_semantics<parallel>, #tpu.dimension_semantics<arbitrary>], iteration_bounds = array<i64: 1, 3>, scalar_prefetch = 0 : i64, scratch_operands = 1 : i64, tpu.core_type = #tpu.core_type<tc>, window_params = [{transform_indices = @transform_0, window_bounds = array<i64: 16, 256>}, {transform_indices = @transform_1, window_bounds = array<i64: 256, 512>}, {transform_indices = @transform_2, window_bounds = array<i64: 256, 256>}, {transform_indices = @transform_3, window_bounds = array<i64: 16, 256>}]} {
    %c0_i32 = arith.constant 0 : i32
    %0 = arith.cmpi eq, %arg1, %c0_i32 : i32
    %1 = arith.extui %0 : i1 to i32
    %c0_i32_0 = arith.constant 0 : i32
    %2 = arith.cmpi ne, %1, %c0_i32_0 : i32
    scf.if %2 {
      %cst_13 = arith.constant 0.000000e+00 : f32
      %24 = vector.broadcast %cst_13 : f32 to vector<16x256xf32>
      %c0_14 = arith.constant 0 : index
      %c0_15 = arith.constant 0 : index
      %25 = vector.load %arg6[%c0_14, %c0_15] : memref<16x256xf32, #tpu.memory_space<vmem>>, vector<16x256xf32>
      tpu.vector_store %arg6[%c0_14, %c0_15], %24 {strides = array<i32>} : memref<16x256xf32, #tpu.memory_space<vmem>>, vector<16x256xf32>,
    } else {
    }
    %c0 = arith.constant 0 : index
    %c0_1 = arith.constant 0 : index
    %3 = vector.load %arg2[%c0, %c0_1] : memref<16x256xbf16, #tpu.memory_space<vmem>>, vector<16x256xbf16>
    %c0_2 = arith.constant 0 : index
    %c0_3 = arith.constant 0 : index
    %4 = vector.load %arg3[%c0_2, %c0_3] : memref<256x512xbf16, #tpu.memory_space<vmem>>, vector<256x512xbf16>
    %cst = arith.constant dense<0.000000e+00> : vector<16x512xf32>
    %5 = tpu.matmul %3, %4, %cst {dimension_numbers = #tpu.dot_dimension_numbers<[1], [0], [0], [1], [0, 0, 1, 1], [], []>} : vector<16x256xbf16>, vector<256x512xbf16>, vector<16x512xf32> -> vector<16x512xf32>
    %6 = vector.extract_strided_slice %5 {offsets = [0, 0], sizes = [16, 256], strides = [1, 1]} : vector<16x512xf32> to vector<16x256xf32>
    %7 = vector.extract_strided_slice %5 {offsets = [0, 256], sizes = [16, 256], strides = [1, 1]} : vector<16x512xf32> to vector<16x256xf32>
    %8 = arith.negf %6 : vector<16x256xf32>
    %9 = math.exp %8 : vector<16x256xf32>
    %cst_4 = arith.constant 1.000000e+00 : f32
    %10 = vector.broadcast %cst_4 : f32 to vector<16x256xf32>
    %11 = arith.addf %10, %9 : vector<16x256xf32>
    %12 = arith.divf %10, %11 : vector<16x256xf32>
    %13 = arith.mulf %6, %12 : vector<16x256xf32>
    %14 = arith.mulf %13, %7 : vector<16x256xf32>
    %c0_5 = arith.constant 0 : index
    %c0_6 = arith.constant 0 : index
    %15 = vector.load %arg6[%c0_5, %c0_6] : memref<16x256xf32, #tpu.memory_space<vmem>>, vector<16x256xf32>
    %16 = arith.truncf %14 : vector<16x256xf32> to vector<16x256xbf16>
    %c0_7 = arith.constant 0 : index
    %c0_8 = arith.constant 0 : index
    %17 = vector.load %arg4[%c0_7, %c0_8] : memref<256x256xbf16, #tpu.memory_space<vmem>>, vector<256x256xbf16>
    %cst_9 = arith.constant dense<0.000000e+00> : vector<16x256xf32>
    %18 = tpu.matmul %16, %17, %cst_9 {dimension_numbers = #tpu.dot_dimension_numbers<[1], [0], [0], [1], [0, 0, 1, 1], [], []>} : vector<16x256xbf16>, vector<256x256xbf16>, vector<16x256xf32> -> vector<16x256xf32>
    %19 = arith.addf %15, %18 : vector<16x256xf32>
    %c0_10 = arith.constant 0 : index
    %c0_11 = arith.constant 0 : index
    %20 = vector.load %arg6[%c0_10, %c0_11] : memref<16x256xf32, #tpu.memory_space<vmem>>, vector<16x256xf32>
    tpu.vector_store %arg6[%c0_10, %c0_11], %19 {strides = array<i32>} : memref<16x256xf32, #tpu.memory_space<vmem>>, vector<16x256xf32>,
    %c2_i32 = arith.constant 2 : i32
    %21 = arith.cmpi eq, %arg1, %c2_i32 : i32
    %22 = arith.extui %21 : i1 to i32
    %c0_i32_12 = arith.constant 0 : i32
    %23 = arith.cmpi ne, %22, %c0_i32_12 : i32
    scf.if %23 {
      %c0_13 = arith.constant 0 : index
      %c0_14 = arith.constant 0 : index
      %24 = vector.load %arg6[%c0_13, %c0_14] : memref<16x256xf32, #tpu.memory_space<vmem>>, vector<16x256xf32>
      %c0_15 = arith.constant 0 : index
      %c0_16 = arith.constant 0 : index
      %25 = vector.load %arg5[%c0_15, %c0_16] : memref<16x256xf32, #tpu.memory_space<vmem>>, vector<16x256xf32>
      tpu.vector_store %arg5[%c0_15, %c0_16], %24 {strides = array<i32>} : memref<16x256xf32, #tpu.memory_space<vmem>>, vector<16x256xf32>,
    } else {
    }
    return
  }
  func.func @transform_0(%arg0: i32, %arg1: i32) -> (i32, i32) {
    %c0_i32 = arith.constant 0 : i32
    %c0_i32_0 = arith.constant 0 : i32
    return %arg0, %c0_i32 : i32, i32
  }
  func.func @transform_1(%arg0: i32, %arg1: i32) -> (i32, i32) {
    %c0_i32 = arith.constant 0 : i32
    %c0_i32_0 = arith.constant 0 : i32
    return %c0_i32, %arg1 : i32, i32
  }
  func.func @transform_2(%arg0: i32, %arg1: i32) -> (i32, i32) {
    %c0_i32 = arith.constant 0 : i32
    %c0_i32_0 = arith.constant 0 : i32
    return %arg1, %c0_i32 : i32, i32
  }
  func.func @transform_3(%arg0: i32, %arg1: i32) -> (i32, i32) {
    %c0_i32 = arith.constant 0 : i32
    %c0_i32_0 = arith.constant 0 : i32
    return %arg0, %c0_i32 : i32, i32
  }
}

</mosaic_0001>

<llo_original>
// kernel: tpu_custom_call.1
$region0: #{tpu_custom_call.1}
  #allocation0 [shape = 'u32[]', space=smem, size = 0x4, offset = 0x4, fixed_abs, tag = 'smem constant byte address 0x4 - core index']
  #allocation1 [shape = 'u32[144,128]{1,0:T(1,128)}', space=vmem, size = 0x12000, scoped, tag = 'internal scratch']
  #allocation2 [shape = 'f32[16,256]{1,0:T(8,128)}', space=vmem, size = 0x4000, scoped, tag = 'scratch operand']
  %s0 = inlined_call_operand.hbm [shape: bf16[16,256], index: 0, kind: input, shape index: {}]
  %s1 = inlined_call_operand.hbm [shape: bf16[256,1536], index: 1, kind: input, shape index: {}]
  %s2 = inlined_call_operand.hbm [shape: bf16[768,256], index: 2, kind: input, shape index: {}]
  %s3 = inlined_call_operand.hbm [shape: f32[16,256], index: 3, kind: output, shape index: {}]
  %s4 = sld [smem:[#allocation0]]
  $region65: #{tpu_custom_call.1} parent=0
    _
  %s6 = ssub.s32 1, %s4
  %s7 = scalar_select 0, %s6, %s4
  $region1: #{tpu_custom_call.1} parent=0
    #allocation3 [shape = 'u8[8192]{0}', space=vmem, size = 0x2000, scoped, tag = 'input window, operand 0, single buffered']
    #allocation4 [shape = 's32[2]{0}', space=sflag, size = 0x8, scoped, tag = 'scoped memory for tpu_custom_call.1']
    #allocation5 [shape = 's32[2]{0}', space=sflag, size = 0x8, scoped, tag = 'scoped memory for tpu_custom_call.1']
    #allocation6 [shape = 'u8[524288]{0}', space=vmem, size = 0x80000, scoped, tag = 'input window, operand 1']
    #allocation7 [shape = 's32[2]{0}', space=sflag, size = 0x8, scoped, tag = 'scoped memory for tpu_custom_call.1']
    #allocation8 [shape = 'u8[262144]{0}', space=vmem, size = 0x40000, scoped, tag = 'input window, operand 2']
    #allocation9 [shape = 'u8[16384]{0}', space=vmem, size = 0x4000, scoped, tag = 'output window, operand 0, single buffered']
    %8 = vsyncpa [#allocation4], 0
    %9 = vsyncpa [#allocation7], 0
    %s10 = scalar_lea.sflag [#allocation7], 1
    %11 = vsyncpa %s10, 0
    %12 = vsyncpa [#allocation5], 0
    loop: start=0, step=1, limit=5
    $region2: #{tpu_custom_call.1} parent=1 // loop_pre_header
      _
    $region3: #{tpu_custom_call.1} parent=1 // loop_header
      %s14 = sphi 0, %s18
      %p15 = scmp.ge.s32.totalorder %s14, 5
      %s21 = sphi 0, %s33
      %s22 = sphi 0, %s29
      %s23 = sphi 0, %s21
      %s24 = sphi 0, %s22
      %s25 = sphi 0, %s23
      %s26 = sphi 0, %s24
      %s36 = sphi 0, %s38
      %s39 = sphi 0, %s36
      %s40 = sphi 0, %s39
      %s56 = sphi 0, %s40
      %s62 = sphi 0, %s64
      %s65 = sphi 0, %s62
      %s66 = sphi 0, %s65
      %s82 = sphi 0, %s66
      %s88 = sphi 0, %s90
      %s91 = sphi 0, %s88
      %s92 = sphi 0, %s91
      %s108 = sphi 0, %s92
      %s114 = sphi 0, %s116
      %s117 = sphi 0, %s114
      %s118 = sphi 0, %s117
      %s134 = sphi 0, %s118
    $region4: #{tpu_custom_call.1} parent=1 // loop_header_branch
      %17 = sbr.rel (%p15) target = $region8
    $region5: #{tpu_custom_call.1} parent=1 // loop_body
      %s19 = ssub.s32 %s14, 1
      %s20 = ssub.s32 %s14, 2
      %s27 = sadd.s32 1, %s22
      %p28 = scmp.ge.s32.totalorder %s27, 3
      %s29 = scalar_select %p28, 0, %s27
      %s30 = sadd.s32 1, %s21
      %s31 = scalar_select %p28, %s30, %s21
      %p32 = scmp.ge.s32.totalorder %s31, 1
      %s33 = scalar_select %p32, 0, %s31
      %s34 = ssub.s32 %s21, %s33
      %p35 = scmp.eq.s32.totalorder %s34, 0
      %s37 = sadd.s32 %s36, 1
      %s38 = scalar_select %p35, %s36, %s37
      %p41 = pneg %p35
      %p42 = scmp.eq.s32.totalorder %s14, 2
      %p43 = por %p41, %p42
      %p44 = scmp.ne.s32.totalorder %s36, %s39
      %p45 = scmp.eq.s32.totalorder %s14, 0
      %p46 = por %p44, %p45
      %p47 = scmp.ne.s32.totalorder %s36, %s39
      %p48 = scmp.eq.s32.totalorder %s19, 2
      %p49 = por %p47, %p48
      %p50 = scmp.ne.s32.totalorder %s39, %s40
      %p51 = scmp.eq.s32.totalorder %s19, 0
      %p52 = por %p50, %p51
      %p53 = scmp.ne.s32.totalorder %s39, %s40
      %p54 = scmp.eq.s32.totalorder %s20, 2
      %p55 = por %p53, %p54
      %p57 = scmp.ne.s32.totalorder %s40, %s56
      %p58 = scmp.eq.s32.totalorder %s20, 0
      %p59 = por %p57, %p58
      %s60 = ssub.s32 %s22, %s29
      %p61 = scmp.eq.s32.totalorder %s60, 0
      %s63 = sadd.s32 %s62, 1
      %s64 = scalar_select %p61, %s62, %s63
      %p67 = pneg %p61
      %p68 = scmp.eq.s32.totalorder %s14, 2
      %p69 = por %p67, %p68
      %p70 = scmp.ne.s32.totalorder %s62, %s65
      %p71 = scmp.eq.s32.totalorder %s14, 0
      %p72 = por %p70, %p71
      %p73 = scmp.ne.s32.totalorder %s62, %s65
      %p74 = scmp.eq.s32.totalorder %s19, 2
      %p75 = por %p73, %p74
      %p76 = scmp.ne.s32.totalorder %s65, %s66
      %p77 = scmp.eq.s32.totalorder %s19, 0
      %p78 = por %p76, %p77
      %p79 = scmp.ne.s32.totalorder %s65, %s66
      %p80 = scmp.eq.s32.totalorder %s20, 2
      %p81 = por %p79, %p80
      %p83 = scmp.ne.s32.totalorder %s66, %s82
      %p84 = scmp.eq.s32.totalorder %s20, 0
      %p85 = por %p83, %p84
      %s86 = ssub.s32 %s22, %s29
      %p87 = scmp.eq.s32.totalorder %s86, 0
      %s89 = sadd.s32 %s88, 1
      %s90 = scalar_select %p87, %s88, %s89
      %p93 = pneg %p87
      %p94 = scmp.eq.s32.totalorder %s14, 2
      %p95 = por %p93, %p94
      %p96 = scmp.ne.s32.totalorder %s88, %s91
      %p97 = scmp.eq.s32.totalorder %s14, 0
      %p98 = por %p96, %p97
      %p99 = scmp.ne.s32.totalorder %s88, %s91
      %p100 = scmp.eq.s32.totalorder %s19, 2
      %p101 = por %p99, %p100
      %p102 = scmp.ne.s32.totalorder %s91, %s92
      %p103 = scmp.eq.s32.totalorder %s19, 0
      %p104 = por %p102, %p103
      %p105 = scmp.ne.s32.totalorder %s91, %s92
      %p106 = scmp.eq.s32.totalorder %s20, 2
      %p107 = por %p105, %p106
      %p109 = scmp.ne.s32.totalorder %s92, %s108
      %p110 = scmp.eq.s32.totalorder %s20, 0
      %p111 = por %p109, %p110
      %s112 = ssub.s32 %s21, %s33
      %p113 = scmp.eq.s32.totalorder %s112, 0
      %s115 = sadd.s32 %s114, 1
      %s116 = scalar_select %p113, %s114, %s115
      %p119 = pneg %p113
      %p120 = scmp.eq.s32.totalorder %s14, 2
      %p121 = por %p119, %p120
      %p122 = scmp.ne.s32.totalorder %s114, %s117
      %p123 = scmp.eq.s32.totalorder %s14, 0
      %p124 = por %p122, %p123
      %p125 = scmp.ne.s32.totalorder %s114, %s117
      %p126 = scmp.eq.s32.totalorder %s19, 2
      %p127 = por %p125, %p126
      %p128 = scmp.ne.s32.totalorder %s117, %s118
      %p129 = scmp.eq.s32.totalorder %s19, 0
      %p130 = por %p128, %p129
      %p131 = scmp.ne.s32.totalorder %s117, %s118
      %p132 = scmp.eq.s32.totalorder %s20, 2
      %p133 = por %p131, %p132
      %p135 = scmp.ne.s32.totalorder %s118, %s134
      %p136 = scmp.eq.s32.totalorder %s20, 0
      %p137 = por %p135, %p136
      %p138 = scmp.le.s32.totalorder 1, %s14
      %p139 = scmp.lt.s32.totalorder %s14, 4
      %p140 = pnand %p138, %p139
      %p141 = pneg %p140
      // Predicated region
      $region9: #{tpu_custom_call.1} parent=5 // pred_check
        _
      $region10: #{tpu_custom_call.1} parent=5 // pred_check_branch
        %143 = sbr.rel (%p140) target = $region12
      $region11: #{tpu_custom_call.1} parent=5 // pred_region
        %s144 = ssub.s32 %s14, 1
        // Predicated region
        $region13: #{tpu_custom_call.1} parent=11 // pred_check
          %p145 = pneg %p52
        $region14: #{tpu_custom_call.1} parent=11 // pred_check_branch
          %147 = sbr.rel (%p145) target = $region16
        $region15: #{tpu_custom_call.1} parent=11 // pred_region
          %s148 = smul.u32 2, %s23
          %s150 = ssub.s32 256, 256
          %151 = vsyncadd [#allocation4], %s150
          %s152 = smul.addr %s148, 2
          %s153 = smul.addr %s152, 64
          %s154 = scalar_lea.hbm %s0, %s153
          %s155 = sshll.u32 [#allocation3], 4
          %s156 = int_to_ptr.vmem [resolvable:$true] %s155
          %161 = dma.hbm_to_vmem [thread:$0]  %s154, 256, %s156, [#allocation4], 128, 128, 8
        $region16: #{tpu_custom_call.1} parent=11 // pred_fallthru
          _
      $region12: #{tpu_custom_call.1} parent=5 // pred_fallthru
        _
      %p162 = scmp.lt.s32.totalorder %s14, 3
      // Predicated region
      $region17: #{tpu_custom_call.1} parent=5 // pred_check
        %p163 = pneg %p162
      $region18: #{tpu_custom_call.1} parent=5 // pred_check_branch
        %165 = sbr.rel (%p163) target = $region20
      $region19: #{tpu_custom_call.1} parent=5 // pred_region
        // Predicated region
        $region21: #{tpu_custom_call.1} parent=19 // pred_check
          %p166 = pneg %p72
        $region22: #{tpu_custom_call.1} parent=19 // pred_check_branch
          %168 = sbr.rel (%p166) target = $region24
        $region23: #{tpu_custom_call.1} parent=19 // pred_region
          %s169 = sand.u32 %s14, 1
          %s170 = scalar_lea.sflag [#allocation7], %s169
          %s171 = sand.u32 %s62, 1
          %s172 = smul.addr %s171, 512
          %s173 = scalar_lea.vmem [#allocation6], %s172
          %s174 = smul.u32 4, %s22
          %s176 = ssub.s32 8192, 8192
          %177 = vsyncadd %s170, %s176
          %s178 = smul.addr %s174, 64
          %s179 = scalar_lea.hbm %s1, %s178
          %s180 = sshll.u32 %s173, 4
          %s181 = int_to_ptr.vmem [resolvable:$true] %s180
          %186 = dma.hbm_to_vmem [thread:$0]  %s179, 8192, %s181, %s170, 768, 256, 16
        $region24: #{tpu_custom_call.1} parent=19 // pred_fallthru
          _
        // Predicated region
        $region25: #{tpu_custom_call.1} parent=19 // pred_check
          %p187 = pneg %p98
        $region26: #{tpu_custom_call.1} parent=19 // pred_check_branch
          %189 = sbr.rel (%p187) target = $region28
        $region27: #{tpu_custom_call.1} parent=19 // pred_region
          %s190 = sand.u32 %s14, 1
          %s191 = scalar_lea.sflag [#allocation7], %s190
          %s192 = sand.u32 %s88, 1
          %s193 = smul.addr %s192, 256
          %s194 = scalar_lea.vmem [#allocation8], %s193
          %s195 = smul.u32 32, %s22
          %s197 = ssub.s32 4096, 4096
          %198 = vsyncadd %s191, %s197
          %s199 = smul.addr %s195, 2
          %s200 = smul.addr %s199, 64
          %s201 = scalar_lea.hbm %s2, %s200
          %s202 = sshll.u32 %s194, 4
          %s203 = int_to_ptr.vmem [resolvable:$true] %s202
          %208 = dma.hbm_to_vmem [thread:$0]  %s201, 4096, %s203, %s191, 128, 128, 8
        $region28: #{tpu_custom_call.1} parent=19 // pred_fallthru
          _
      $region20: #{tpu_custom_call.1} parent=5 // pred_fallthru
        _
      %p209 = scmp.le.s32.totalorder 1, %s14
      %p210 = scmp.lt.s32.totalorder %s14, 4
      %p211 = pnand %p209, %p210
      %p212 = pneg %p211
      // Predicated region
      $region29: #{tpu_custom_call.1} parent=5 // pred_check
        _
      $region30: #{tpu_custom_call.1} parent=5 // pred_check_branch
        %214 = sbr.rel (%p211) target = $region32
      $region31: #{tpu_custom_call.1} parent=5 // pred_region
        %s215 = ssub.s32 %s14, 1
        // Predicated region
        $region33: #{tpu_custom_call.1} parent=31 // pred_check
          %p216 = pneg %p52
        $region34: #{tpu_custom_call.1} parent=31 // pred_check_branch
          %218 = sbr.rel (%p216) target = $region36
        $region35: #{tpu_custom_call.1} parent=31 // pred_region
          %219 = dma.done [#allocation4], 256
        $region36: #{tpu_custom_call.1} parent=31 // pred_fallthru
          _
        %s220 = sand.u32 %s19, 1
        %s221 = scalar_lea.sflag [#allocation7], %s220
        %s222 = sand.u32 %s65, 1
        %s223 = smul.addr %s222, 512
        %s224 = scalar_lea.vmem [#allocation6], %s223
        // Predicated region
        $region37: #{tpu_custom_call.1} parent=31 // pred_check
          %p225 = pneg %p78
        $region38: #{tpu_custom_call.1} parent=31 // pred_check_branch
          %227 = sbr.rel (%p225) target = $region40
        $region39: #{tpu_custom_call.1} parent=31 // pred_region
          %228 = dma.done %s221, 8192
        $region40: #{tpu_custom_call.1} parent=31 // pred_fallthru
          _
        %s229 = sand.u32 %s19, 1
        %s230 = scalar_lea.sflag [#allocation7], %s229
        %s231 = sand.u32 %s91, 1
        %s232 = smul.addr %s231, 256
        %s233 = scalar_lea.vmem [#allocation8], %s232
        // Predicated region
        $region41: #{tpu_custom_call.1} parent=31 // pred_check
          %p234 = pneg %p104
        $region42: #{tpu_custom_call.1} parent=31 // pred_check_branch
          %236 = sbr.rel (%p234) target = $region44
        $region43: #{tpu_custom_call.1} parent=31 // pred_region
          %237 = dma.done %s230, 4096
        $region44: #{tpu_custom_call.1} parent=31 // pred_fallthru
          _
        %p238 = pneg %p52
        %p239 = pneg %p49
        %s240 = sand.u32 %s19, 1
        %s241 = scalar_lea.sflag [#allocation7], %s240
        %s242 = sand.u32 %s65, 1
        %s243 = smul.addr %s242, 512
        %s244 = scalar_lea.vmem [#allocation6], %s243
        %p245 = pneg %p78
        %p246 = pneg %p75
        %s247 = sand.u32 %s19, 1
        %s248 = scalar_lea.sflag [#allocation7], %s247
        %s249 = sand.u32 %s91, 1
        %s250 = smul.addr %s249, 256
        %s251 = scalar_lea.vmem [#allocation8], %s250
        %p252 = pneg %p104
        %p253 = pneg %p101
        %p254 = pneg %p130
        %p255 = pneg %p127
        %s256 = smul.u32 2, %s23
        %s257 = smul.u32 4, %s24
        %s258 = smul.u32 32, %s24
        %s259 = smul.u32 2, %s23
        %p260 = scmp.eq.s32.totalorder %s24, 0
        // Predicated region
        $region45: #{tpu_custom_call.1} parent=31 // pred_check
          %p261 = pneg %p260
        $region46: #{tpu_custom_call.1} parent=31 // pred_check_branch
          %263 = sbr.rel (%p261) target = $region48
        $region47: #{tpu_custom_call.1} parent=31 // pred_region
          %264 = vst [vmem:[#allocation2] sm:$0xff] 0.0
          %265 = vst [vmem:[#allocation2 + $0x8] sm:$0xff] 0.0
          %266 = vst [vmem:[#allocation2 + $0x10] sm:$0xff] 0.0
          %267 = vst [vmem:[#allocation2 + $0x18] sm:$0xff] 0.0
        $region48: #{tpu_custom_call.1} parent=31 // pred_fallthru
          _
        %v268 = vld [vmem:[#allocation3] sm:$0xff]
        %v269 = vld [vmem:[#allocation3 + $0x8] sm:$0xff]
        %v270 = vld [vmem:[%s224] sm:$0xff]
        %v271 = vld [vmem:[%s224 + $0x8] sm:$0xff]
        %v272 = vld [vmem:[%s224 + $0x10] sm:$0xff]
        %v273 = vld [vmem:[%s224 + $0x18] sm:$0xff]
        %v274 = vld [vmem:[%s224 + $0x20] sm:$0xff]
        %v275 = vld [vmem:[%s224 + $0x28] sm:$0xff]
        %v276 = vld [vmem:[%s224 + $0x30] sm:$0xff]
        %v277 = vld [vmem:[%s224 + $0x38] sm:$0xff]
        %v278 = vld [vmem:[%s224 + $0x40] sm:$0xff]
        %v279 = vld [vmem:[%s224 + $0x48] sm:$0xff]
        %v280 = vld [vmem:[%s224 + $0x50] sm:$0xff]
        %v281 = vld [vmem:[%s224 + $0x58] sm:$0xff]
        %v282 = vld [vmem:[%s224 + $0x60] sm:$0xff]
        %v283 = vld [vmem:[%s224 + $0x68] sm:$0xff]
        %v284 = vld [vmem:[%s224 + $0x70] sm:$0xff]
        %v285 = vld [vmem:[%s224 + $0x78] sm:$0xff]
        %v286 = vld [vmem:[%s224 + $0x80] sm:$0xff]
        %v287 = vld [vmem:[%s224 + $0x88] sm:$0xff]
        %v288 = vld [vmem:[%s224 + $0x90] sm:$0xff]
        %v289 = vld [vmem:[%s224 + $0x98] sm:$0xff]
        %v290 = vld [vmem:[%s224 + $0xa0] sm:$0xff]
        %v291 = vld [vmem:[%s224 + $0xa8] sm:$0xff]
        %v292 = vld [vmem:[%s224 + $0xb0] sm:$0xff]
        %v293 = vld [vmem:[%s224 + $0xb8] sm:$0xff]
        %v294 = vld [vmem:[%s224 + $0xc0] sm:$0xff]
        %v295 = vld [vmem:[%s224 + $0xc8] sm:$0xff]
        %v296 = vld [vmem:[%s224 + $0xd0] sm:$0xff]
        %v297 = vld [vmem:[%s224 + $0xd8] sm:$0xff]
        %v298 = vld [vmem:[%s224 + $0xe0] sm:$0xff]
        %v299 = vld [vmem:[%s224 + $0xe8] sm:$0xff]
        %v300 = vld [vmem:[%s224 + $0xf0] sm:$0xff]
        %v301 = vld [vmem:[%s224 + $0xf8] sm:$0xff]
        %v302 = vld [vmem:[%s224 + $0x100] sm:$0xff]
        %v303 = vld [vmem:[%s224 + $0x108] sm:$0xff]
        %v304 = vld [vmem:[%s224 + $0x110] sm:$0xff]
        %v305 = vld [vmem:[%s224 + $0x118] sm:$0xff]
        %v306 = vld [vmem:[%s224 + $0x120] sm:$0xff]
        %v307 = vld [vmem:[%s224 + $0x128] sm:$0xff]
        %v308 = vld [vmem:[%s224 + $0x130] sm:$0xff]
        %v309 = vld [vmem:[%s224 + $0x138] sm:$0xff]
        %v310 = vld [vmem:[%s224 + $0x140] sm:$0xff]
        %v311 = vld [vmem:[%s224 + $0x148] sm:$0xff]
        %v312 = vld [vmem:[%s224 + $0x150] sm:$0xff]
        %v313 = vld [vmem:[%s224 + $0x158] sm:$0xff]
        %v314 = vld [vmem:[%s224 + $0x160] sm:$0xff]
        %v315 = vld [vmem:[%s224 + $0x168] sm:$0xff]
        %v316 = vld [vmem:[%s224 + $0x170] sm:$0xff]
        %v317 = vld [vmem:[%s224 + $0x178] sm:$0xff]
        %v318 = vld [vmem:[%s224 + $0x180] sm:$0xff]
        %v319 = vld [vmem:[%s224 + $0x188] sm:$0xff]
        %v320 = vld [vmem:[%s224 + $0x190] sm:$0xff]
        %v321 = vld [vmem:[%s224 + $0x198] sm:$0xff]
        %v322 = vld [vmem:[%s224 + $0x1a0] sm:$0xff]
        %v323 = vld [vmem:[%s224 + $0x1a8] sm:$0xff]
        %v324 = vld [vmem:[%s224 + $0x1b0] sm:$0xff]
        %v325 = vld [vmem:[%s224 + $0x1b8] sm:$0xff]
        %v326 = vld [vmem:[%s224 + $0x1c0] sm:$0xff]
        %v327 = vld [vmem:[%s224 + $0x1c8] sm:$0xff]
        %v328 = vld [vmem:[%s224 + $0x1d0] sm:$0xff]
        %v329 = vld [vmem:[%s224 + $0x1d8] sm:$0xff]
        %v330 = vld [vmem:[%s224 + $0x1e0] sm:$0xff]
        %v331 = vld [vmem:[%s224 + $0x1e8] sm:$0xff]
        %v332 = vld [vmem:[%s224 + $0x1f0] sm:$0xff]
        %v333 = vld [vmem:[%s224 + $0x1f8] sm:$0xff]
        %v336 = vunpack.c.l.b16 %v268
        %v337 = vunpack.c.h.b16 %v268
        %v338 = vunpack.c.l.b16 %v269
        %v339 = vunpack.c.h.b16 %v269
        %v340 = vpack.c.b16 %v338, %v336
        %v341 = vpack.c.b16 %v339, %v337
        %v408 = vunpack.c.l.b16 %v270
        %v409 = vunpack.c.h.b16 %v270
        %v410 = vunpack.c.l.b16 %v271
        %v411 = vunpack.c.h.b16 %v271
        %v412 = vunpack.c.l.b16 %v272
        %v413 = vunpack.c.h.b16 %v272
        %v414 = vunpack.c.l.b16 %v273
        %v415 = vunpack.c.h.b16 %v273
        %v416 = vunpack.c.l.b16 %v274
        %v417 = vunpack.c.h.b16 %v274
        %v418 = vunpack.c.l.b16 %v275
        %v419 = vunpack.c.h.b16 %v275
        %v420 = vunpack.c.l.b16 %v276
        %v421 = vunpack.c.h.b16 %v276
        %v422 = vunpack.c.l.b16 %v277
        %v423 = vunpack.c.h.b16 %v277
        %v424 = vunpack.c.l.b16 %v278
        %v425 = vunpack.c.h.b16 %v278
        %v426 = vunpack.c.l.b16 %v279
        %v427 = vunpack.c.h.b16 %v279
        %v428 = vunpack.c.l.b16 %v280
        %v429 = vunpack.c.h.b16 %v280
        %v430 = vunpack.c.l.b16 %v281
        %v431 = vunpack.c.h.b16 %v281
        %v432 = vunpack.c.l.b16 %v282
        %v433 = vunpack.c.h.b16 %v282
        %v434 = vunpack.c.l.b16 %v283
        %v435 = vunpack.c.h.b16 %v283
        %v436 = vunpack.c.l.b16 %v284
        %v437 = vunpack.c.h.b16 %v284
        %v438 = vunpack.c.l.b16 %v285
        %v439 = vunpack.c.h.b16 %v285
        %v440 = vunpack.c.l.b16 %v286
        %v441 = vunpack.c.h.b16 %v286
        %v442 = vunpack.c.l.b16 %v287
        %v443 = vunpack.c.h.b16 %v287
        %v444 = vunpack.c.l.b16 %v288
        %v445 = vunpack.c.h.b16 %v288
        %v446 = vunpack.c.l.b16 %v289
        %v447 = vunpack.c.h.b16 %v289
        %v448 = vunpack.c.l.b16 %v290
        %v449 = vunpack.c.h.b16 %v290
        %v450 = vunpack.c.l.b16 %v291
        %v451 = vunpack.c.h.b16 %v291
        %v452 = vunpack.c.l.b16 %v292
        %v453 = vunpack.c.h.b16 %v292
        %v454 = vunpack.c.l.b16 %v293
        %v455 = vunpack.c.h.b16 %v293
        %v456 = vunpack.c.l.b16 %v294
        %v457 = vunpack.c.h.b16 %v294
        %v458 = vunpack.c.l.b16 %v295
        %v459 = vunpack.c.h.b16 %v295
        %v460 = vunpack.c.l.b16 %v296
        %v461 = vunpack.c.h.b16 %v296
        %v462 = vunpack.c.l.b16 %v297
        %v463 = vunpack.c.h.b16 %v297
        %v464 = vunpack.c.l.b16 %v298
        %v465 = vunpack.c.h.b16 %v298
        %v466 = vunpack.c.l.b16 %v299
        %v467 = vunpack.c.h.b16 %v299
        %v468 = vunpack.c.l.b16 %v300
        %v469 = vunpack.c.h.b16 %v300
        %v470 = vunpack.c.l.b16 %v301
        %v471 = vunpack.c.h.b16 %v301
        %v472 = vunpack.c.l.b16 %v302
        %v473 = vunpack.c.h.b16 %v302
        %v474 = vunpack.c.l.b16 %v303
        %v475 = vunpack.c.h.b16 %v303
        %v476 = vunpack.c.l.b16 %v304
        %v477 = vunpack.c.h.b16 %v304
        %v478 = vunpack.c.l.b16 %v305
        %v479 = vunpack.c.h.b16 %v305
        %v480 = vunpack.c.l.b16 %v306
        %v481 = vunpack.c.h.b16 %v306
        %v482 = vunpack.c.l.b16 %v307
        %v483 = vunpack.c.h.b16 %v307
        %v484 = vunpack.c.l.b16 %v308
        %v485 = vunpack.c.h.b16 %v308
        %v486 = vunpack.c.l.b16 %v309
        %v487 = vunpack.c.h.b16 %v309
        %v488 = vunpack.c.l.b16 %v310
        %v489 = vunpack.c.h.b16 %v310
        %v490 = vunpack.c.l.b16 %v311
        %v491 = vunpack.c.h.b16 %v311
        %v492 = vunpack.c.l.b16 %v312
        %v493 = vunpack.c.h.b16 %v312
        %v494 = vunpack.c.l.b16 %v313
        %v495 = vunpack.c.h.b16 %v313
        %v496 = vunpack.c.l.b16 %v314
        %v497 = vunpack.c.h.b16 %v314
        %v498 = vunpack.c.l.b16 %v315
        %v499 = vunpack.c.h.b16 %v315
        %v500 = vunpack.c.l.b16 %v316
        %v501 = vunpack.c.h.b16 %v316
        %v502 = vunpack.c.l.b16 %v317
        %v503 = vunpack.c.h.b16 %v317
        %v504 = vunpack.c.l.b16 %v318
        %v505 = vunpack.c.h.b16 %v318
        %v506 = vunpack.c.l.b16 %v319
        %v507 = vunpack.c.h.b16 %v319
        %v508 = vunpack.c.l.b16 %v320
        %v509 = vunpack.c.h.b16 %v320
        %v510 = vunpack.c.l.b16 %v321
        %v511 = vunpack.c.h.b16 %v321
        %v512 = vunpack.c.l.b16 %v322
        %v513 = vunpack.c.h.b16 %v322
        %v514 = vunpack.c.l.b16 %v323
        %v515 = vunpack.c.h.b16 %v323
        %v516 = vunpack.c.l.b16 %v324
        %v517 = vunpack.c.h.b16 %v324
        %v518 = vunpack.c.l.b16 %v325
        %v519 = vunpack.c.h.b16 %v325
        %v520 = vunpack.c.l.b16 %v326
        %v521 = vunpack.c.h.b16 %v326
        %v522 = vunpack.c.l.b16 %v327
        %v523 = vunpack.c.h.b16 %v327
        %v524 = vunpack.c.l.b16 %v328
        %v525 = vunpack.c.h.b16 %v328
        %v526 = vunpack.c.l.b16 %v329
        %v527 = vunpack.c.h.b16 %v329
        %v528 = vunpack.c.l.b16 %v330
        %v529 = vunpack.c.h.b16 %v330
        %v530 = vunpack.c.l.b16 %v331
        %v531 = vunpack.c.h.b16 %v331
        %v532 = vunpack.c.l.b16 %v332
        %v533 = vunpack.c.h.b16 %v332
        %v534 = vunpack.c.l.b16 %v333
        %v535 = vunpack.c.h.b16 %v333
        %v536 = vpack.c.b16 %v412, %v408
        %v537 = vpack.c.b16 %v413, %v409
        %v538 = vpack.c.b16 %v414, %v410
        %v539 = vpack.c.b16 %v415, %v411
        %v540 = vpack.c.b16 %v420, %v416
        %v541 = vpack.c.b16 %v421, %v417
        %v542 = vpack.c.b16 %v422, %v418
        %v543 = vpack.c.b16 %v423, %v419
        %v544 = vpack.c.b16 %v428, %v424
        %v545 = vpack.c.b16 %v429, %v425
        %v546 = vpack.c.b16 %v430, %v426
        %v547 = vpack.c.b16 %v431, %v427
        %v548 = vpack.c.b16 %v436, %v432
        %v549 = vpack.c.b16 %v437, %v433
        %v550 = vpack.c.b16 %v438, %v434
        %v551 = vpack.c.b16 %v439, %v435
        %v552 = vpack.c.b16 %v444, %v440
        %v553 = vpack.c.b16 %v445, %v441
        %v554 = vpack.c.b16 %v446, %v442
        %v555 = vpack.c.b16 %v447, %v443
        %v556 = vpack.c.b16 %v452, %v448
        %v557 = vpack.c.b16 %v453, %v449
        %v558 = vpack.c.b16 %v454, %v450
        %v559 = vpack.c.b16 %v455, %v451
        %v560 = vpack.c.b16 %v460, %v456
        %v561 = vpack.c.b16 %v461, %v457
        %v562 = vpack.c.b16 %v462, %v458
        %v563 = vpack.c.b16 %v463, %v459
        %v564 = vpack.c.b16 %v468, %v464
        %v565 = vpack.c.b16 %v469, %v465
        %v566 = vpack.c.b16 %v470, %v466
        %v567 = vpack.c.b16 %v471, %v467
        %v568 = vpack.c.b16 %v476, %v472
        %v569 = vpack.c.b16 %v477, %v473
        %v570 = vpack.c.b16 %v478, %v474
        %v571 = vpack.c.b16 %v479, %v475
        %v572 = vpack.c.b16 %v484, %v480
        %v573 = vpack.c.b16 %v485, %v481
        %v574 = vpack.c.b16 %v486, %v482
        %v575 = vpack.c.b16 %v487, %v483
        %v576 = vpack.c.b16 %v492, %v488
        %v577 = vpack.c.b16 %v493, %v489
        %v578 = vpack.c.b16 %v494, %v490
        %v579 = vpack.c.b16 %v495, %v491
        %v580 = vpack.c.b16 %v500, %v496
        %v581 = vpack.c.b16 %v501, %v497
        %v582 = vpack.c.b16 %v502, %v498
        %v583 = vpack.c.b16 %v503, %v499
        %v584 = vpack.c.b16 %v508, %v504
        %v585 = vpack.c.b16 %v509, %v505
        %v586 = vpack.c.b16 %v510, %v506
        %v587 = vpack.c.b16 %v511, %v507
        %v588 = vpack.c.b16 %v516, %v512
        %v589 = vpack.c.b16 %v517, %v513
        %v590 = vpack.c.b16 %v518, %v514
        %v591 = vpack.c.b16 %v519, %v515
        %v592 = vpack.c.b16 %v524, %v520
        %v593 = vpack.c.b16 %v525, %v521
        %v594 = vpack.c.b16 %v526, %v522
        %v595 = vpack.c.b16 %v527, %v523
        %v596 = vpack.c.b16 %v532, %v528
        %v597 = vpack.c.b16 %v533, %v529
        %v598 = vpack.c.b16 %v534, %v530
        %v599 = vpack.c.b16 %v535, %v531
        %664 = vmatprep.subr.bf16.mxu0 %v537
        %665 = vmatpush1.bf16.msra.mxu0 %v536
        %666 = vmatprep.subr.bf16.mxu0 %v541
        %667 = vmatpush1.bf16.msra.mxu0 %v540
        %668 = vmatprep.subr.bf16.mxu0 %v545
        %669 = vmatpush1.bf16.msra.mxu0 %v544
        %670 = vmatprep.subr.bf16.mxu0 %v549
        %671 = vmatpush1.bf16.msra.mxu0 %v548
        %672 = vmatprep.subr.bf16.mxu0 %v553
        %673 = vmatpush1.bf16.msra.mxu0 %v552
        %674 = vmatprep.subr.bf16.mxu0 %v557
        %675 = vmatpush1.bf16.msra.mxu0 %v556
        %676 = vmatprep.subr.bf16.mxu0 %v561
        %677 = vmatpush1.bf16.msra.mxu0 %v560
        %678 = vmatprep.subr.bf16.mxu0 %v565
        %679 = vmatpush1.bf16.msra.mxu0 %v564
        %680 = vmatprep.subr.bf16.mxu0 %v569
        %681 = vmatpush1.bf16.msra.mxu0 %v568
        %682 = vmatprep.subr.bf16.mxu0 %v573
        %683 = vmatpush1.bf16.msra.mxu0 %v572
        %684 = vmatprep.subr.bf16.mxu0 %v577
        %685 = vmatpush1.bf16.msra.mxu0 %v576
        %686 = vmatprep.subr.bf16.mxu0 %v581
        %687 = vmatpush1.bf16.msra.mxu0 %v580
        %688 = vmatprep.subr.bf16.mxu0 %v585
        %689 = vmatpush1.bf16.msra.mxu0 %v584
        %690 = vmatprep.subr.bf16.mxu0 %v589
        %691 = vmatpush1.bf16.msra.mxu0 %v588
        %692 = vmatprep.subr.bf16.mxu0 %v593
        %693 = vmatpush1.bf16.msra.mxu0 %v592
        %694 = vmatprep.subr.bf16.mxu0 %v597
        %695 = vmatpush1.bf16.msra.mxu0 %v596
        %696 = vmatprep.mubr.bf16.mxu0 %v341
        %697 = vmatmul.mubr.bf16.gmra.mrb[0].mxu0 %v340
        %v698 = vpop.f32.mrb[0].mxu0
        %v699 = vadd.f32 0.0, %v698
        %v700 = vpop.f32.mrb[0].mxu0
        %v701 = vadd.f32 0.0, %v700
        %v702 = vpop.f32.mrb[0].mxu0
        %v703 = vadd.f32 0.0, %v702
        %v704 = vpop.f32.mrb[0].mxu0
        %v705 = vadd.f32 0.0, %v704
        %706 = vdwg.mxu0
        %707 = vmatprep.subr.bf16.mxu0 %v539
        %708 = vmatpush1.bf16.msra.mxu0 %v538
        %709 = vmatprep.subr.bf16.mxu0 %v543
        %710 = vmatpush1.bf16.msra.mxu0 %v542
        %711 = vmatprep.subr.bf16.mxu0 %v547
        %712 = vmatpush1.bf16.msra.mxu0 %v546
        %713 = vmatprep.subr.bf16.mxu0 %v551
        %714 = vmatpush1.bf16.msra.mxu0 %v550
        %715 = vmatprep.subr.bf16.mxu0 %v555
        %716 = vmatpush1.bf16.msra.mxu0 %v554
        %717 = vmatprep.subr.bf16.mxu0 %v559
        %718 = vmatpush1.bf16.msra.mxu0 %v558
        %719 = vmatprep.subr.bf16.mxu0 %v563
        %720 = vmatpush1.bf16.msra.mxu0 %v562
        %721 = vmatprep.subr.bf16.mxu0 %v567
        %722 = vmatpush1.bf16.msra.mxu0 %v566
        %723 = vmatprep.subr.bf16.mxu0 %v571
        %724 = vmatpush1.bf16.msra.mxu0 %v570
        %725 = vmatprep.subr.bf16.mxu0 %v575
        %726 = vmatpush1.bf16.msra.mxu0 %v574
        %727 = vmatprep.subr.bf16.mxu0 %v579
        %728 = vmatpush1.bf16.msra.mxu0 %v578
        %729 = vmatprep.subr.bf16.mxu0 %v583
        %730 = vmatpush1.bf16.msra.mxu0 %v582
        %731 = vmatprep.subr.bf16.mxu0 %v587
        %732 = vmatpush1.bf16.msra.mxu0 %v586
        %733 = vmatprep.subr.bf16.mxu0 %v591
        %734 = vmatpush1.bf16.msra.mxu0 %v590
        %735 = vmatprep.subr.bf16.mxu0 %v595
        %736 = vmatpush1.bf16.msra.mxu0 %v594
        %737 = vmatprep.subr.bf16.mxu0 %v599
        %738 = vmatpush1.bf16.msra.mxu0 %v598
        %739 = vmatprep.mubr.bf16.mxu0 %v341
        %740 = vmatmul.mubr.bf16.gmra.mrb[0].mxu0 %v340
        %v741 = vpop.f32.mrb[0].mxu0
        %v742 = vadd.f32 0.0, %v741
        %v743 = vpop.f32.mrb[0].mxu0
        %v744 = vadd.f32 0.0, %v743
        %v745 = vpop.f32.mrb[0].mxu0
        %v746 = vadd.f32 0.0, %v745
        %v747 = vpop.f32.mrb[0].mxu0
        %v748 = vadd.f32 0.0, %v747
        %749 = vdwg.mxu0
        %v750 = vxor.u32 %v699, 2147483648
        %v751 = vxor.u32 %v701, 2147483648
        %v752 = vxor.u32 %v703, 2147483648
        %v753 = vxor.u32 %v705, 2147483648
        %v754 = vmul.f32 %v750, 1.442695
        %v755 = vpow.pop %v754
        %v756 = vmul.f32 %v751, 1.442695
        %v757 = vpow.pop %v756
        %v758 = vmul.f32 %v752, 1.442695
        %v759 = vpow.pop %v758
        %v760 = vmul.f32 %v753, 1.442695
        %v761 = vpow.pop %v760
        %v762 = vadd.f32 %v755, 1.0
        %v763 = vadd.f32 %v757, 1.0
        %v764 = vadd.f32 %v759, 1.0
        %v765 = vadd.f32 %v761, 1.0
        %v766 = vrcp.pop %v762
        %v767 = vmul.f32 1.0, %v766
        %v768 = vrcp.pop %v763
        %v769 = vmul.f32 1.0, %v768
        %v770 = vrcp.pop %v764
        %v771 = vmul.f32 1.0, %v770
        %v772 = vrcp.pop %v765
        %v773 = vmul.f32 1.0, %v772
        %v774 = vmul.f32 %v699, %v767
        %v775 = vmul.f32 %v701, %v769
        %v776 = vmul.f32 %v703, %v771
        %v777 = vmul.f32 %v705, %v773
        %v778 = vmul.f32 %v774, %v742
        %v779 = vmul.f32 %v775, %v744
        %v780 = vmul.f32 %v776, %v746
        %v781 = vmul.f32 %v777, %v748
        %v782 = vld [vmem:[#allocation2] sm:$0xff]
        %v783 = vld [vmem:[#allocation2 + $0x8] sm:$0xff]
        %v784 = vld [vmem:[#allocation2 + $0x10] sm:$0xff]
        %v785 = vld [vmem:[#allocation2 + $0x18] sm:$0xff]
        %v786 = vpack.c.bf16 %v780, %v778
        %v787 = vpack.c.bf16 %v781, %v779
        %v788 = vld [vmem:[%s233] sm:$0xff]
        %v789 = vld [vmem:[%s233 + $0x8] sm:$0xff]
        %v790 = vld [vmem:[%s233 + $0x10] sm:$0xff]
        %v791 = vld [vmem:[%s233 + $0x18] sm:$0xff]
        %v792 = vld [vmem:[%s233 + $0x20] sm:$0xff]
        %v793 = vld [vmem:[%s233 + $0x28] sm:$0xff]
        %v794 = vld [vmem:[%s233 + $0x30] sm:$0xff]
        %v795 = vld [vmem:[%s233 + $0x38] sm:$0xff]
        %v796 = vld [vmem:[%s233 + $0x40] sm:$0xff]
        %v797 = vld [vmem:[%s233 + $0x48] sm:$0xff]
        %v798 = vld [vmem:[%s233 + $0x50] sm:$0xff]
        %v799 = vld [vmem:[%s233 + $0x58] sm:$0xff]
        %v800 = vld [vmem:[%s233 + $0x60] sm:$0xff]
        %v801 = vld [vmem:[%s233 + $0x68] sm:$0xff]
        %v802 = vld [vmem:[%s233 + $0x70] sm:$0xff]
        %v803 = vld [vmem:[%s233 + $0x78] sm:$0xff]
        %v804 = vld [vmem:[%s233 + $0x80] sm:$0xff]
        %v805 = vld [vmem:[%s233 + $0x88] sm:$0xff]
        %v806 = vld [vmem:[%s233 + $0x90] sm:$0xff]
        %v807 = vld [vmem:[%s233 + $0x98] sm:$0xff]
        %v808 = vld [vmem:[%s233 + $0xa0] sm:$0xff]
        %v809 = vld [vmem:[%s233 + $0xa8] sm:$0xff]
        %v810 = vld [vmem:[%s233 + $0xb0] sm:$0xff]
        %v811 = vld [vmem:[%s233 + $0xb8] sm:$0xff]
        %v812 = vld [vmem:[%s233 + $0xc0] sm:$0xff]
        %v813 = vld [vmem:[%s233 + $0xc8] sm:$0xff]
        %v814 = vld [vmem:[%s233 + $0xd0] sm:$0xff]
        %v815 = vld [vmem:[%s233 + $0xd8] sm:$0xff]
        %v816 = vld [vmem:[%s233 + $0xe0] sm:$0xff]
        %v817 = vld [vmem:[%s233 + $0xe8] sm:$0xff]
        %v818 = vld [vmem:[%s233 + $0xf0] sm:$0xff]
        %v819 = vld [vmem:[%s233 + $0xf8] sm:$0xff]
        %v852 = vunpack.c.l.b16 %v788
        %v853 = vunpack.c.h.b16 %v788
        %v854 = vunpack.c.l.b16 %v789
        %v855 = vunpack.c.h.b16 %v789
        %v856 = vunpack.c.l.b16 %v790
        %v857 = vunpack.c.h.b16 %v790
        %v858 = vunpack.c.l.b16 %v791
        %v859 = vunpack.c.h.b16 %v791
        %v860 = vunpack.c.l.b16 %v792
        %v861 = vunpack.c.h.b16 %v792
        %v862 = vunpack.c.l.b16 %v793
        %v863 = vunpack.c.h.b16 %v793
        %v864 = vunpack.c.l.b16 %v794
        %v865 = vunpack.c.h.b16 %v794
        %v866 = vunpack.c.l.b16 %v795
        %v867 = vunpack.c.h.b16 %v795
        %v868 = vunpack.c.l.b16 %v796
        %v869 = vunpack.c.h.b16 %v796
        %v870 = vunpack.c.l.b16 %v797
        %v871 = vunpack.c.h.b16 %v797
        %v872 = vunpack.c.l.b16 %v798
        %v873 = vunpack.c.h.b16 %v798
        %v874 = vunpack.c.l.b16 %v799
        %v875 = vunpack.c.h.b16 %v799
        %v876 = vunpack.c.l.b16 %v800
        %v877 = vunpack.c.h.b16 %v800
        %v878 = vunpack.c.l.b16 %v801
        %v879 = vunpack.c.h.b16 %v801
        %v880 = vunpack.c.l.b16 %v802
        %v881 = vunpack.c.h.b16 %v802
        %v882 = vunpack.c.l.b16 %v803
        %v883 = vunpack.c.h.b16 %v803
        %v884 = vunpack.c.l.b16 %v804
        %v885 = vunpack.c.h.b16 %v804
        %v886 = vunpack.c.l.b16 %v805
        %v887 = vunpack.c.h.b16 %v805
        %v888 = vunpack.c.l.b16 %v806
        %v889 = vunpack.c.h.b16 %v806
        %v890 = vunpack.c.l.b16 %v807
        %v891 = vunpack.c.h.b16 %v807
        %v892 = vunpack.c.l.b16 %v808
        %v893 = vunpack.c.h.b16 %v808
        %v894 = vunpack.c.l.b16 %v809
        %v895 = vunpack.c.h.b16 %v809
        %v896 = vunpack.c.l.b16 %v810
        %v897 = vunpack.c.h.b16 %v810
        %v898 = vunpack.c.l.b16 %v811
        %v899 = vunpack.c.h.b16 %v811
        %v900 = vunpack.c.l.b16 %v812
        %v901 = vunpack.c.h.b16 %v812
        %v902 = vunpack.c.l.b16 %v813
        %v903 = vunpack.c.h.b16 %v813
        %v904 = vunpack.c.l.b16 %v814
        %v905 = vunpack.c.h.b16 %v814
        %v906 = vunpack.c.l.b16 %v815
        %v907 = vunpack.c.h.b16 %v815
        %v908 = vunpack.c.l.b16 %v816
        %v909 = vunpack.c.h.b16 %v816
        %v910 = vunpack.c.l.b16 %v817
        %v911 = vunpack.c.h.b16 %v817
        %v912 = vunpack.c.l.b16 %v818
        %v913 = vunpack.c.h.b16 %v818
        %v914 = vunpack.c.l.b16 %v819
        %v915 = vunpack.c.h.b16 %v819
        %v916 = vpack.c.b16 %v854, %v852
        %v917 = vpack.c.b16 %v855, %v853
        %v918 = vpack.c.b16 %v858, %v856
        %v919 = vpack.c.b16 %v859, %v857
        %v920 = vpack.c.b16 %v862, %v860
        %v921 = vpack.c.b16 %v863, %v861
        %v922 = vpack.c.b16 %v866, %v864
        %v923 = vpack.c.b16 %v867, %v865
        %v924 = vpack.c.b16 %v870, %v868
        %v925 = vpack.c.b16 %v871, %v869
        %v926 = vpack.c.b16 %v874, %v872
        %v927 = vpack.c.b16 %v875, %v873
        %v928 = vpack.c.b16 %v878, %v876
        %v929 = vpack.c.b16 %v879, %v877
        %v930 = vpack.c.b16 %v882, %v880
        %v931 = vpack.c.b16 %v883, %v881
        %v932 = vpack.c.b16 %v886, %v884
        %v933 = vpack.c.b16 %v887, %v885
        %v934 = vpack.c.b16 %v890, %v888
        %v935 = vpack.c.b16 %v891, %v889
        %v936 = vpack.c.b16 %v894, %v892
        %v937 = vpack.c.b16 %v895, %v893
        %v938 = vpack.c.b16 %v898, %v896
        %v939 = vpack.c.b16 %v899, %v897
        %v940 = vpack.c.b16 %v902, %v900
        %v941 = vpack.c.b16 %v903, %v901
        %v942 = vpack.c.b16 %v906, %v904
        %v943 = vpack.c.b16 %v907, %v905
        %v944 = vpack.c.b16 %v910, %v908
        %v945 = vpack.c.b16 %v911, %v909
        %v946 = vpack.c.b16 %v914, %v912
        %v947 = vpack.c.b16 %v915, %v913
        %980 = vmatprep.subr.bf16.mxu0 %v917
        %981 = vmatpush1.bf16.msra.mxu0 %v916
        %982 = vmatprep.subr.bf16.mxu0 %v919
        %983 = vmatpush1.bf16.msra.mxu0 %v918
        %984 = vmatprep.subr.bf16.mxu0 %v921
        %985 = vmatpush1.bf16.msra.mxu0 %v920
        %986 = vmatprep.subr.bf16.mxu0 %v923
        %987 = vmatpush1.bf16.msra.mxu0 %v922
        %988 = vmatprep.subr.bf16.mxu0 %v925
        %989 = vmatpush1.bf16.msra.mxu0 %v924
        %990 = vmatprep.subr.bf16.mxu0 %v927
        %991 = vmatpush1.bf16.msra.mxu0 %v926
        %992 = vmatprep.subr.bf16.mxu0 %v929
        %993 = vmatpush1.bf16.msra.mxu0 %v928
        %994 = vmatprep.subr.bf16.mxu0 %v931
        %995 = vmatpush1.bf16.msra.mxu0 %v930
        %996 = vmatprep.subr.bf16.mxu0 %v933
        %997 = vmatpush1.bf16.msra.mxu0 %v932
        %998 = vmatprep.subr.bf16.mxu0 %v935
        %999 = vmatpush1.bf16.msra.mxu0 %v934
        %1000 = vmatprep.subr.bf16.mxu0 %v937
        %1001 = vmatpush1.bf16.msra.mxu0 %v936
        %1002 = vmatprep.subr.bf16.mxu0 %v939
        %1003 = vmatpush1.bf16.msra.mxu0 %v938
        %1004 = vmatprep.subr.bf16.mxu0 %v941
        %1005 = vmatpush1.bf16.msra.mxu0 %v940
        %1006 = vmatprep.subr.bf16.mxu0 %v943
        %1007 = vmatpush1.bf16.msra.mxu0 %v942
        %1008 = vmatprep.subr.bf16.mxu0 %v945
        %1009 = vmatpush1.bf16.msra.mxu0 %v944
        %1010 = vmatprep.subr.bf16.mxu0 %v947
        %1011 = vmatpush1.bf16.msra.mxu0 %v946
        %1012 = vmatprep.mubr.bf16.mxu0 %v787
        %1013 = vmatmul.mubr.bf16.gmra.mrb[0].mxu0 %v786
        %v1014 = vpop.f32.mrb[0].mxu0
        %v1015 = vadd.f32 0.0, %v1014
        %v1016 = vpop.f32.mrb[0].mxu0
        %v1017 = vadd.f32 0.0, %v1016
        %v1018 = vpop.f32.mrb[0].mxu0
        %v1019 = vadd.f32 0.0, %v1018
        %v1020 = vpop.f32.mrb[0].mxu0
        %v1021 = vadd.f32 0.0, %v1020
        %1022 = vdwg.mxu0
        %v1023 = vadd.f32 %v782, %v1015
        %v1024 = vadd.f32 %v783, %v1017
        %v1025 = vadd.f32 %v784, %v1019
        %v1026 = vadd.f32 %v785, %v1021
        %1027 = vst [vmem:[#allocation2] sm:$0xff] %v1023
        %1028 = vst [vmem:[#allocation2 + $0x8] sm:$0xff] %v1024
        %1029 = vst [vmem:[#allocation2 + $0x10] sm:$0xff] %v1025
        %1030 = vst [vmem:[#allocation2 + $0x18] sm:$0xff] %v1026
        %p1031 = scmp.eq.s32.totalorder %s24, 2
        // Predicated region
        $region49: #{tpu_custom_call.1} parent=31 // pred_check
          %p1032 = pneg %p1031
        $region50: #{tpu_custom_call.1} parent=31 // pred_check_branch
          %1034 = sbr.rel (%p1032) target = $region52
        $region51: #{tpu_custom_call.1} parent=31 // pred_region
          %v1035 = vld [vmem:[#allocation2] sm:$0xff]
          %v1036 = vld [vmem:[#allocation2 + $0x8] sm:$0xff]
          %v1037 = vld [vmem:[#allocation2 + $0x10] sm:$0xff]
          %v1038 = vld [vmem:[#allocation2 + $0x18] sm:$0xff]
          %1039 = vst [vmem:[#allocation9] sm:$0xff] %v1035
          %1040 = vst [vmem:[#allocation9 + $0x8] sm:$0xff] %v1036
          %1041 = vst [vmem:[#allocation9 + $0x10] sm:$0xff] %v1037
          %1042 = vst [vmem:[#allocation9 + $0x18] sm:$0xff] %v1038
        $region52: #{tpu_custom_call.1} parent=31 // pred_fallthru
          _
        // Predicated region
        $region53: #{tpu_custom_call.1} parent=31 // pred_check
          %p1043 = pneg %p127
        $region54: #{tpu_custom_call.1} parent=31 // pred_check_branch
          %1045 = sbr.rel (%p1043) target = $region56
        $region55: #{tpu_custom_call.1} parent=31 // pred_region
          %s1046 = smul.u32 2, %s23
          %s1048 = ssub.s32 512, 512
          %1049 = vsyncadd [#allocation5], %s1048
          %s1050 = smul.addr %s1046, 2
          %s1051 = smul.addr %s1050, 128
          %s1052 = scalar_lea.hbm %s3, %s1051
          %s1053 = sshll.u32 [#allocation9], 4
          %s1054 = int_to_ptr.vmem [resolvable:$true] %s1053
          %1059 = dma.vmem_to_hbm [thread:$0]  %s1054, 512, %s1052, [#allocation5], 256, 256, 16
        $region56: #{tpu_custom_call.1} parent=31 // pred_fallthru
          _
        // Predicated region
        $region57: #{tpu_custom_call.1} parent=31 // pred_check
          %p1060 = pneg %p127
        $region58: #{tpu_custom_call.1} parent=31 // pred_check_branch
          %1062 = sbr.rel (%p1060) target = $region60
        $region59: #{tpu_custom_call.1} parent=31 // pred_region
          %1063 = dma.done [#allocation5], 512
        $region60: #{tpu_custom_call.1} parent=31 // pred_fallthru
          _
      $region32: #{tpu_custom_call.1} parent=5 // pred_fallthru
        _
      %p1064 = scmp.le.s32.totalorder 2, %s14
      // Predicated region
      $region61: #{tpu_custom_call.1} parent=5 // pred_check
        %p1065 = pneg %p1064
      $region62: #{tpu_custom_call.1} parent=5 // pred_check_branch
        %1067 = sbr.rel (%p1065) target = $region64
      $region63: #{tpu_custom_call.1} parent=5 // pred_region
        %s1068 = ssub.s32 %s14, 2
      $region64: #{tpu_custom_call.1} parent=5 // pred_fallthru
        _
    $region6: #{tpu_custom_call.1} parent=1 // loop_footer
      %s18 = sadd.s32 1, %s14
    $region7: #{tpu_custom_call.1} parent=1 // loop_footer_branch
      %13 = sbr.rel target = $region3
    $region8: #{tpu_custom_call.1} parent=1 // loop_exit
      _
    %1069 = vsyncpa [#allocation4], 1
    %s1070 = scalar_lea.sflag [#allocation4], 1
    %1071 = vsyncpa %s1070, 1
    %1072 = vsyncpa [#allocation7], 1
    %s1073 = scalar_lea.sflag [#allocation7], 1
    %1074 = vsyncpa %s1073, 1
    %1075 = vsyncpa [#allocation5], 1
    %s1076 = scalar_lea.sflag [#allocation5], 1
    %1077 = vsyncpa %s1076, 1

</llo_original>
